<compile_context>
chip_gen: v7x
topology: tpu7x:2x2x1
jax: 0.10.0
libtpu: 0.0.40
codegen_flags: <defaults>
</compile_context>

<pallas_src>
import math

import jax
import jax.numpy as jnp
from jax.experimental import pallas as pl
from jax.experimental.pallas import tpu as pltpu


def _degree_kernel(x_ref, w_ref, b_ref, o_ref):
    # sigmoid (EUP) -> matmul (MXU, f32 accumulation) -> bias add (VPU).
    x = x_ref[...]
    op_dtype = w_ref.dtype
    if x.dtype == op_dtype:
        # e.g. bf16 in / bf16 weights on v6e/v7x (or f32/f32): no f32 round
        # trip, no extra (tm, K) f32 VMEM temp.
        xs = jax.nn.sigmoid(x)
    else:
        # mixed dtypes: pointwise math in f32, single cast for the MXU operand.
        xs = jax.nn.sigmoid(x.astype(jnp.float32)).astype(op_dtype)
    acc = jnp.dot(xs, w_ref[...], preferred_element_type=jnp.float32)
    o_ref[...] = (acc + b_ref[...].astype(jnp.float32)).astype(o_ref.dtype)


def degree_layer(x, weight, bias, *, block_m=512, pad_out_lanes=None):
    """y = sigmoid(x) @ weight.T + bias  (PyTorch nn.Linear parameter layout).

    x: (..., inp_size); weight: (out_size, inp_size); bias: (out_size,).
    """
    *lead, inp_size = x.shape
    out_size = weight.shape[0]
    assert weight.shape == (out_size, inp_size)
    assert bias.shape == (out_size,)

    m = math.prod(lead) if lead else 1
    x2d = x.reshape(m, inp_size)

    # ---- lane-dense output (optional): pad N up to a multiple of 128 ----
    if pad_out_lanes is None:
        # Padding costs (n_pad/out_size)x more writeback bytes; default it on
        # only when the relative overhead is modest.
        pad_out_lanes = (out_size % 128 != 0) and out_size >= 128
    if pad_out_lanes and out_size % 128 != 0:
        n_pad = pl.cdiv(out_size, 128) * 128
    else:
        n_pad = out_size

    # One-time transpose to (K, N): MXU-natural layout, so the kernel never
    # needs a cross-lane transpose of the resident weight.
    w_kn = jnp.transpose(weight)            # (inp_size, out_size)
    b_row = bias.reshape(1, out_size)
    if n_pad != out_size:
        w_kn = jnp.pad(w_kn, ((0, 0), (0, n_pad - out_size)))
        b_row = jnp.pad(b_row, ((0, 0), (0, n_pad - out_size)))

    x_bytes = jnp.dtype(x.dtype).itemsize
    w_bytes = jnp.dtype(weight.dtype).itemsize
    out_bytes = x_bytes                      # output dtype == x.dtype

    # Sublane granularity of the input dtype (8 f32 / 16 bf16 / 32 int8 rows).
    sub = max(8, 32 // x_bytes)

    # ---- row-tile size from the chip's VMEM budget ----
    try:
        vmem_cap = int(pltpu.get_tpu_info().vmem_capacity_bytes)
    except Exception:
        vmem_cap = 64 << 20                  # v7x per-core capacity (tightest)
    budget = vmem_cap // 2                   # leave headroom for compiler temps

    fixed = inp_size * n_pad * w_bytes       # resident weight (single buffer)
    fixed += n_pad * w_bytes                 # resident bias
    per_row = 2 * inp_size * x_bytes         # x tile, double-buffered
    per_row += 2 * n_pad * out_bytes         # out tile, double-buffered
    per_row += inp_size * 4                  # f32 sigmoid temp (worst case)
    per_row += inp_size * w_bytes            # MXU-operand cast temp (worst case)
    per_row += n_pad * 4                     # f32 accumulator
    avail = budget - fixed
    if avail > per_row * sub:
        tm_budget = max(sub, (avail // per_row) // sub * sub)
    else:
        tm_budget = sub
    # TODO(synk): if inp_size*out_size ever grows so `fixed` alone blows the
    # VMEM budget, add an N grid axis (and a K axis + f32 accumulator scratch
    # with pl.when init/finalize) instead of keeping the full weight resident.

    tm = min(max(sub, (block_m // sub) * sub), tm_budget, pl.cdiv(m, sub) * sub)
    # Keep >= ~4 grid steps when M permits: software pipelining actually hides
    # the x HBM->VMEM DMA and the "parallel" axis shards across both v7x TCs.
    min_steps = 4
    if m >= min_steps * sub:
        tm = min(tm, max(sub, (m // min_steps) // sub * sub))
    tm = max(sub, (tm // sub) * sub)

    m_pad = pl.cdiv(m, tm) * tm
    if m_pad != m:
        # Padded rows produce sigmoid(0)=0.5 garbage but are sliced off below.
        x2d = jnp.pad(x2d, ((0, m_pad - m), (0, 0)))

    vmem_est = fixed + tm * per_row
    vmem_limit = int(min(int(vmem_cap * 0.9), max(32 << 20, 2 * vmem_est)))

    out2d = pl.pallas_call(
        _degree_kernel,
        out_shape=jax.ShapeDtypeStruct((m_pad, n_pad), x.dtype),
        grid=(m_pad // tm,),
        in_specs=[
            # streamed row tiles of x
            pl.BlockSpec((tm, inp_size), lambda i: (i, 0)),
            # resident parameters: constant index_map -> never refetched;
            # single buffer halves their VMEM footprint.
            pl.BlockSpec((inp_size, n_pad), lambda i: (0, 0),
                         pipeline_mode=pl.Buffered(1)),
            pl.BlockSpec((1, n_pad), lambda i: (0, 0),
                         pipeline_mode=pl.Buffered(1)),
        ],
        out_specs=pl.BlockSpec((tm, n_pad), lambda i: (i, 0)),
        compiler_params=pltpu.CompilerParams(
            dimension_semantics=("parallel",),
            vmem_limit_bytes=vmem_limit,
        ),
    )(x2d, w_kn, b_row)

    out2d = out2d[:m, :out_size]
    return out2d.reshape(*lead, out_size)


if __name__ == "__main__":
    inp_size, out_size = 32, 16
    batch, seq = 2, 8

    key = jax.random.PRNGKey(0)
    kx, kw, kb, kx2 = jax.random.split(key, 4)

    # PyTorch nn.Linear parameter shapes: W (out, in), b (out,)
    bound = 1.0 / (inp_size ** 0.5)
    weight = jax.random.uniform(kw, (out_size, inp_size), jnp.float32, -bound, bound)
    bias = jax.random.uniform(kb, (out_size,), jnp.float32, -bound, bound)

    x = jax.random.normal(kx, (batch, seq, inp_size), jnp.float32)

    y = degree_layer(x, weight, bias)
    jax.block_until_ready(y)

    ref = jax.nn.sigmoid(x) @ weight.T + bias
    assert y.shape == (batch, seq, out_size)
    assert jnp.allclose(y, ref, atol=1e-5, rtol=1e-5)

    # Multi-step grid + row-padding path (m=106 -> tm=24, 5 steps, 14 pad rows).
    x2 = jax.random.normal(kx2, (106, inp_size), jnp.float32)
    y2 = degree_layer(x2, weight, bias)
    jax.block_until_ready(y2)
    ref2 = jax.nn.sigmoid(x2) @ weight.T + bias
    assert jnp.allclose(y2, ref2, atol=1e-5, rtol=1e-5)

    # Lane-dense output path (out_size padded 16 -> 128, sliced after).
    y3 = degree_layer(x2, weight, bias, pad_out_lanes=True)
    jax.block_until_ready(y3)
    assert jnp.allclose(y3, ref2, atol=1e-5, rtol=1e-5)

    print("KERNEL_OK")
</pallas_src>

<mosaic_0001>
module attributes {stable_mosaic.version = 11 : i64} {
  func.func @_degree_kernel(%arg0: i32, %arg1: memref<16x32xf32, #tpu.memory_space<vmem>>, %arg2: memref<32x16xf32, #tpu.memory_space<vmem>>, %arg3: memref<1x16xf32, #tpu.memory_space<vmem>>, %arg4: memref<16x16xf32, #tpu.memory_space<vmem>>) attributes {dimension_semantics = [#tpu.dimension_semantics<parallel>], iteration_bounds = array<i64: 1>, scalar_prefetch = 0 : i64, scratch_operands = 0 : i64, tpu.core_type = #tpu.core_type<tc>, window_params = [{transform_indices = @transform_0, window_bounds = array<i64: 16, 32>}, {pipeline_mode = #tpu.pipeline_mode<synchronous>, transform_indices = @transform_1, window_bounds = array<i64: 32, 16>}, {pipeline_mode = #tpu.pipeline_mode<synchronous>, transform_indices = @transform_2, window_bounds = array<i64: 1, 16>}, {transform_indices = @transform_3, window_bounds = array<i64: 16, 16>}]} {
    %c0 = arith.constant 0 : index
    %c0_0 = arith.constant 0 : index
    %0 = vector.load %arg1[%c0, %c0_0] : memref<16x32xf32, #tpu.memory_space<vmem>>, vector<16x32xf32>
    %1 = arith.negf %0 : vector<16x32xf32>
    %2 = math.exp %1 : vector<16x32xf32>
    %cst = arith.constant 1.000000e+00 : f32
    %3 = vector.broadcast %cst : f32 to vector<16x32xf32>
    %4 = arith.addf %3, %2 : vector<16x32xf32>
    %5 = arith.divf %3, %4 : vector<16x32xf32>
    %c0_1 = arith.constant 0 : index
    %c0_2 = arith.constant 0 : index
    %6 = vector.load %arg2[%c0_1, %c0_2] : memref<32x16xf32, #tpu.memory_space<vmem>>, vector<32x16xf32>
    %cst_3 = arith.constant dense<0.000000e+00> : vector<16x16xf32>
    %7 = tpu.matmul %5, %6, %cst_3 {dimension_numbers = #tpu.dot_dimension_numbers<[1], [0], [0], [1], [0, 0, 1, 1], [], []>} : vector<16x32xf32>, vector<32x16xf32>, vector<16x16xf32> -> vector<16x16xf32>
    %c0_4 = arith.constant 0 : index
    %c0_5 = arith.constant 0 : index
    %8 = vector.load %arg3[%c0_4, %c0_5] : memref<1x16xf32, #tpu.memory_space<vmem>>, vector<1x16xf32>
    %9 = vector.broadcast %8 : vector<1x16xf32> to vector<16x16xf32>
    %10 = arith.addf %7, %9 : vector<16x16xf32>
    %c0_6 = arith.constant 0 : index
    %c0_7 = arith.constant 0 : index
    %11 = vector.load %arg4[%c0_6, %c0_7] : memref<16x16xf32, #tpu.memory_space<vmem>>, vector<16x16xf32>
    tpu.vector_store %arg4[%c0_6, %c0_7], %10 {strides = array<i32>} : memref<16x16xf32, #tpu.memory_space<vmem>>, vector<16x16xf32>,
    return
  }
  func.func @transform_0(%arg0: i32) -> (i32, i32) {
    %c0_i32 = arith.constant 0 : i32
    %c0_i32_0 = arith.constant 0 : i32
    return %arg0, %c0_i32 : i32, i32
  }
  func.func @transform_1(%arg0: i32) -> (i32, i32) {
    %c0_i32 = arith.constant 0 : i32
    %c0_i32_0 = arith.constant 0 : i32
    %c0_i32_1 = arith.constant 0 : i32
    return %c0_i32, %c0_i32_0 : i32, i32
  }
  func.func @transform_2(%arg0: i32) -> (i32, i32) {
    %c0_i32 = arith.constant 0 : i32
    %c0_i32_0 = arith.constant 0 : i32
    %c0_i32_1 = arith.constant 0 : i32
    return %c0_i32, %c0_i32_0 : i32, i32
  }
  func.func @transform_3(%arg0: i32) -> (i32, i32) {
    %c0_i32 = arith.constant 0 : i32
    %c0_i32_0 = arith.constant 0 : i32
    return %arg0, %c0_i32 : i32, i32
  }
}

</mosaic_0001>

<llo_original>
// kernel: tpu_custom_call.1
$region0: #{tpu_custom_call.1}
  #allocation0 [shape = 'u32[]', space=smem, size = 0x4, offset = 0x4, fixed_abs, tag = 'smem constant byte address 0x4 - core index']
  #allocation1 [shape = 'u32[144,128]{1,0:T(1,128)}', space=vmem, size = 0x12000, scoped, tag = 'internal scratch']
  %s0 = inlined_call_operand.vmem [shape: f32[16,32], index: 0, kind: input, shape index: {}]
  %s1 = inlined_call_operand.vmem [shape: f32[32,16], index: 1, kind: input, shape index: {}]
  %s2 = inlined_call_operand.vmem [shape: f32[1,16], index: 2, kind: input, shape index: {}]
  %s3 = inlined_call_operand.hbm [shape: f32[16,16], index: 3, kind: output, shape index: {}]
  %s4 = sld [smem:[#allocation0]]
  $region22: #{tpu_custom_call.1} parent=0
    _
  %s6 = ssub.s32 1, %s4
  %s7 = scalar_select 0, %s6, %s4
  $region1: #{tpu_custom_call.1} parent=0
    #allocation2 [shape = 'u8[8192]{0}', space=vmem, size = 0x2000, scoped, tag = 'output window, operand 0, single buffered']
    #allocation3 [shape = 's32[1]{0}', space=sflag, size = 0x4, scoped, tag = 'scoped memory for tpu_custom_call.1']
    %8 = vsyncpa [#allocation3], 0
    // Predicated region
    $region2: #{tpu_custom_call.1} parent=1 // pred_check
      _
    $region3: #{tpu_custom_call.1} parent=1 // pred_check_branch
      %10 = sbr.rel (0) target = $region5
    $region4: #{tpu_custom_call.1} parent=1 // pred_region
      _
    $region5: #{tpu_custom_call.1} parent=1 // pred_fallthru
      _
    // Predicated region
    $region6: #{tpu_custom_call.1} parent=1 // pred_check
      _
    $region7: #{tpu_custom_call.1} parent=1 // pred_check_branch
      %12 = sbr.rel (0) target = $region9
    $region8: #{tpu_custom_call.1} parent=1 // pred_region
      _
    $region9: #{tpu_custom_call.1} parent=1 // pred_fallthru
      _
    // Predicated region
    $region10: #{tpu_custom_call.1} parent=1 // pred_check
      _
    $region11: #{tpu_custom_call.1} parent=1 // pred_check_branch
      %14 = sbr.rel (0) target = $region13
    $region12: #{tpu_custom_call.1} parent=1 // pred_region
      _
    $region13: #{tpu_custom_call.1} parent=1 // pred_fallthru
      _
    %v15 = vld [vmem:[%s0] sm:$0xff]
    %v16 = vld [vmem:[%s0 + $0x8] sm:$0xff]
    %v17 = vxor.u32 %v15, 2147483648
    %v18 = vxor.u32 %v16, 2147483648
    %v19 = vmul.f32 %v17, 1.442695
    %v20 = vpow.pop %v19
    %v21 = vmul.f32 %v18, 1.442695
    %v22 = vpow.pop %v21
    %v23 = vadd.f32 %v20, 1.0
    %v24 = vadd.f32 %v22, 1.0
    %v25 = vrcp.pop %v23
    %v26 = vmul.f32 1.0, %v25
    %v27 = vrcp.pop %v24
    %v28 = vmul.f32 1.0, %v27
    %v29 = vld [vmem:[%s1] sm:$0xff]
    %v30 = vld [vmem:[%s1 + $0x8] sm:$0xff]
    %v31 = vld [vmem:[%s1 + $0x10] sm:$0xff]
    %v32 = vld [vmem:[%s1 + $0x18] sm:$0xff]
    %v33 = vld [vmem:[%s2] sm:$0x1]
    %v35 = vlaneseq
    %v36 = vshrl.u32 %v35, 7
    %v37 = vsub.s32 0, %v36
    %v38 = vrot.slane %v33, %v37
    %vm40 = vcmask 261120
    %v42 = vsel %vm40, %v26, 0
    %v45 = vsel %vm40, %v28, 0
    %47 = vmatprep.subr.mxu0 0.0
    %48 = vmatpush1.msra.mxu0 %v29
    %49 = vmatprep.subr.mxu0 0.0
    %50 = vmatpush1.msra.mxu0 %v30
    %51 = vmatprep.subr.mxu0 0.0
    %52 = vmatpush1.msra.mxu0 %v31
    %53 = vmatprep.subr.mxu0 0.0
    %54 = vmatpush1.msra.mxu0 %v32
    %55 = vmatprep.subr.mxu0 0.0
    %56 = vmatpush1.msra.mxu0 0.0
    %57 = vmatprep.subr.mxu0 0.0
    %58 = vmatpush1.msra.mxu0 0.0
    %59 = vmatprep.subr.mxu0 0.0
    %60 = vmatpush1.msra.mxu0 0.0
    %61 = vmatprep.subr.mxu0 0.0
    %62 = vmatpush1.msra.mxu0 0.0
    %63 = vmatprep.subr.mxu0 0.0
    %64 = vmatpush1.msra.mxu0 0.0
    %65 = vmatprep.subr.mxu0 0.0
    %66 = vmatpush1.msra.mxu0 0.0
    %67 = vmatprep.subr.mxu0 0.0
    %68 = vmatpush1.msra.mxu0 0.0
    %69 = vmatprep.subr.mxu0 0.0
    %70 = vmatpush1.msra.mxu0 0.0
    %71 = vmatprep.subr.mxu0 0.0
    %72 = vmatpush1.msra.mxu0 0.0
    %73 = vmatprep.subr.mxu0 0.0
    %74 = vmatpush1.msra.mxu0 0.0
    %75 = vmatprep.subr.mxu0 0.0
    %76 = vmatpush1.msra.mxu0 0.0
    %77 = vmatprep.subr.mxu0 0.0
    %78 = vmatpush1.msra.mxu0 0.0
    %79 = vmatprep.subr.mxu0 0.0
    %80 = vmatpush1.msra.mxu0 0.0
    %81 = vmatprep.subr.mxu0 0.0
    %82 = vmatpush1.msra.mxu0 0.0
    %83 = vmatprep.subr.mxu0 0.0
    %84 = vmatpush1.msra.mxu0 0.0
    %85 = vmatprep.subr.mxu0 0.0
    %86 = vmatpush1.msra.mxu0 0.0
    %87 = vmatprep.subr.mxu0 0.0
    %88 = vmatpush1.msra.mxu0 0.0
    %89 = vmatprep.subr.mxu0 0.0
    %90 = vmatpush1.msra.mxu0 0.0
    %91 = vmatprep.subr.mxu0 0.0
    %92 = vmatpush1.msra.mxu0 0.0
    %93 = vmatprep.subr.mxu0 0.0
    %94 = vmatpush1.msra.mxu0 0.0
    %95 = vmatprep.subr.mxu0 0.0
    %96 = vmatpush1.msra.mxu0 0.0
    %97 = vmatprep.subr.mxu0 0.0
    %98 = vmatpush1.msra.mxu0 0.0
    %99 = vmatprep.subr.mxu0 0.0
    %100 = vmatpush1.msra.mxu0 0.0
    %101 = vmatprep.subr.mxu0 0.0
    %102 = vmatpush1.msra.mxu0 0.0
    %103 = vmatprep.subr.mxu0 0.0
    %104 = vmatpush1.msra.mxu0 0.0
    %105 = vmatprep.subr.mxu0 0.0
    %106 = vmatpush1.msra.mxu0 0.0
    %107 = vmatprep.subr.mxu0 0.0
    %108 = vmatpush1.msra.mxu0 0.0
    %109 = vmatprep.subr.mxu0 0.0
    %110 = vmatpush1.msra.mxu0 0.0
    %111 = vmatprep.mubr.f32.mxu0 0.0
    %112 = vmatmul.mubr.f32.gmra.mrb[0].mxu0 %v42
    %v113 = vpop.f32.mrb[0].mxu0
    %v114 = vadd.f32 %v38, %v113
    %v115 = vpop.f32.mrb[0].mxu0
    %116 = vmatprep.mubr.f32.mxu0 0.0
    %117 = vmatmul.mubr.f32.gmra.mrb[0].mxu0 %v45
    %v118 = vpop.f32.mrb[0].mxu0
    %v119 = vadd.f32 %v38, %v118
    %v120 = vpop.f32.mrb[0].mxu0
    %121 = vdwg.mxu0
    %vm122 = vcmask 130048
    %123 = vst.msk [vmem:[#allocation2] sm:$0xff] %vm122, %v114
    %124 = vst.msk [vmem:[#allocation2 + $0x8] sm:$0xff] %vm122, %v119
    // Predicated region
    $region14: #{tpu_custom_call.1} parent=1 // pred_check
      _
    $region15: #{tpu_custom_call.1} parent=1 // pred_check_branch
      %126 = sbr.rel (0) target = $region17
    $region16: #{tpu_custom_call.1} parent=1 // pred_region
      %s128 = ssub.s32 256, 256
      %129 = vsyncadd [#allocation3], %s128
      %s130 = sshll.u32 [#allocation2], 4
      %s131 = int_to_ptr.vmem [resolvable:$true] %s130
      %136 = dma.vmem_to_hbm [thread:$0]  %s131, 256, %s3, [#allocation3], 128, 128, 8
    $region17: #{tpu_custom_call.1} parent=1 // pred_fallthru
      _
    // Predicated region
    $region18: #{tpu_custom_call.1} parent=1 // pred_check
      _
    $region19: #{tpu_custom_call.1} parent=1 // pred_check_branch
      %138 = sbr.rel (0) target = $region21
    $region20: #{tpu_custom_call.1} parent=1 // pred_region
      %139 = dma.done [#allocation3], 256
    $region21: #{tpu_custom_call.1} parent=1 // pred_fallthru
      _
    %140 = vsyncpa [#allocation3], 1

</llo_original>
